<compile_context>
chip_gen: v5e
topology: v5e:2x2
jax: 0.10.0
libtpu: 0.0.40
codegen_flags: <defaults>
</compile_context>

<pallas_src>
import functools
import math

import jax
import jax.numpy as jnp
from jax.experimental import pallas as pl
from jax.experimental.pallas import tpu as pltpu


def _round_up(x, m):
    return (x + m - 1) // m * m


def _vmem_capacity_bytes():
    """Generation-aware VMEM capacity (v5e/v6e: 128 MiB, v7x: 64 MiB)."""
    try:
        cap = int(pltpu.get_tpu_info().vmem_capacity_bytes)
        if cap > 0:
            return cap
    except Exception:
        pass
    return 64 << 20  # conservative fallback (v7x-class)


def _store(o_ref, lin, *, concat, act, out_pad):
    """Write the f32 result tile (lane-dense, static slices for concat)."""
    if concat:
        o_ref[:, :out_pad] = lin.astype(o_ref.dtype)
        o_ref[:, out_pad:] = act(lin).astype(o_ref.dtype)
    elif act is not None:
        o_ref[...] = act(lin).astype(o_ref.dtype)
    else:
        o_ref[...] = lin.astype(o_ref.dtype)


def _node_update_kernel(*refs, test, concat, act, out_pad):
    """Resident-weight path: one row tile, full K in one MXU call."""
    if test:
        h_ref, norm_ref, w_ref, b_ref, o_ref = refs
    else:
        h_ref, w_ref, b_ref, o_ref = refs

    # Native-dtype operands on the MXU, f32 accumulation.
    lin = jnp.dot(h_ref[...], w_ref[...], preferred_element_type=jnp.float32)
    if test:
        # Row scaling commutes with the matmul; apply post-matmul in f32.
        lin = lin * norm_ref[...]
    lin = lin + b_ref[...]
    _store(o_ref, lin, concat=concat, act=act, out_pad=out_pad)


def _node_update_kernel_ktiled(*refs, test, concat, act, out_pad):
    """K-tiled path: f32 VMEM accumulator, K axis last ("arbitrary")."""
    if test:
        h_ref, norm_ref, w_ref, b_ref, o_ref, acc_ref = refs
    else:
        h_ref, w_ref, b_ref, o_ref, acc_ref = refs
    k = pl.program_id(1)

    @pl.when(k == 0)
    def _():
        acc_ref[...] = jnp.zeros_like(acc_ref)

    acc_ref[...] += jnp.dot(h_ref[...], w_ref[...],
                            preferred_element_type=jnp.float32)

    @pl.when(k == pl.num_programs(1) - 1)
    def _():
        lin = acc_ref[...]
        if test:
            lin = lin * norm_ref[...]
        lin = lin + b_ref[...]
        _store(o_ref, lin, concat=concat, act=act, out_pad=out_pad)


def node_update(h, norm, weight, bias, *, test=False, concat=False,
                activation=jax.nn.relu, max_resident_weight_bytes=None):
    """Pallas implementation of NodeUpdate.forward.

    h:      [N, in_feats]
    norm:   [N, 1]                 (only used when test=True)
    weight: [out_feats, in_feats]  (PyTorch nn.Linear layout)
    bias:   [out_feats]
    returns [N, out_feats]         (or [N, 2*out_feats] if concat=True)
    """
    if concat and activation is None:
        raise ValueError("concat=True requires an activation "
                         "(the PyTorch module would crash too).")

    N, in_feats = h.shape
    out_feats = weight.shape[0]
    itm = jnp.dtype(h.dtype).itemsize

    out_pad = _round_up(out_feats, 128)
    out_cols = 2 * out_pad if concat else out_pad

    cap = _vmem_capacity_bytes()
    budget = max(32 << 20, min((cap * 3) // 4, 100 << 20))   # ~48 MiB on v7x, ~96 MiB on v5e/v6e

    # Switch to K tiling when a (double-buffered) resident W^T gets too big.
    if max_resident_weight_bytes is None:
        max_resident_weight_bytes = (8 << 20) if cap <= (64 << 20) else (16 << 20)
    use_k_tiling = in_feats * out_pad * itm > max_resident_weight_bytes

    # ---- prepare weight / bias (pre-transposed, lane-padded; cheap one-off) ----
    # NOTE: for repeated layer calls these could be prepared once at param setup.
    if use_k_tiling:
        in_pad = _round_up(in_feats, 128)
        w_t = jnp.pad(weight.T.astype(h.dtype),
                      ((0, in_pad - in_feats), (0, out_pad - out_feats)))
        h_in = h if in_pad == in_feats else jnp.pad(h, ((0, 0), (0, in_pad - in_feats)))
    else:
        in_pad = in_feats          # no padding / no HBM copy of h on the common path
        w_t = jnp.pad(weight.T.astype(h.dtype), ((0, 0), (0, out_pad - out_feats)))
        h_in = h
    b2d = jnp.pad(bias.astype(jnp.float32), (0, out_pad - out_feats)).reshape(1, out_pad)
    norm_in = norm.astype(jnp.float32) if test else None

    # ---- VMEM-budgeted tile selection -----------------------------------------
    def footprint(tm, tk):
        fp = 2 * tm * tk * itm                       # h tile (double-buffered)
        fp += 2 * tm * out_cols * itm                # out tile (double-buffered)
        fp += 2 * tk * out_pad * itm                 # W^T block (double-buffered)
        fp += 2 * 8 * out_pad * 4                    # bias (sublane-padded, f32)
        if test:
            fp += 2 * tm * 128 * 4                   # norm tile (lane-padded, f32)
        fp += (2 if concat else 1) * tm * out_pad * 4  # live f32 result (+ act copy)
        if use_k_tiling:
            fp += tm * out_pad * 4                   # f32 accumulator scratch
        return fp

    n8 = _round_up(max(N, 1), 8)
    row_cands = [c for c in (1024, 512, 256, 128, 64, 32, 16, 8) if c <= n8] or [8]

    if use_k_tiling:
        k_cands = [c for c in (512, 256, 128) if in_pad % c == 0]
        tile_m, tile_k = 8, k_cands[-1]
        done = False
        for tm in row_cands:
            for tk in k_cands:
                if footprint(tm, tk) <= budget:
                    tile_m, tile_k = tm, tk
                    done = True
                    break
            if done:
                break
        # TODO(synk): if even (8, 128) tiles exceed the budget (gigantic out_feats),
        # an extra grid axis over the output columns would be needed.
    else:
        tile_k = in_pad
        tile_m = 8
        for tm in row_cands:
            if footprint(tm, tile_k) <= budget:
                tile_m = tm
                break

    # Guarantee >= 2 row-grid steps when possible so ("parallel", ...) can shard
    # across both TensorCores on v7x (no effect on single-TC v5e/v6e).
    while tile_m > 8 and pl.cdiv(N, tile_m) < 2:
        tile_m //= 2

    vmem_limit = int(min(cap, max(footprint(tile_m, tile_k) + (8 << 20), 32 << 20)))

    kernel_kwargs = dict(test=test, concat=concat, act=activation, out_pad=out_pad)

    # ---- grid / specs ----------------------------------------------------------
    if use_k_tiling:
        grid = (pl.cdiv(N, tile_m), in_pad // tile_k)
        in_specs = [pl.BlockSpec((tile_m, tile_k), lambda i, k: (i, k))]
        operands = [h_in]
        if test:
            in_specs.append(pl.BlockSpec((tile_m, 1), lambda i, k: (i, 0)))
            operands.append(norm_in)
        in_specs += [pl.BlockSpec((tile_k, out_pad), lambda i, k: (k, 0)),
                     pl.BlockSpec((1, out_pad), lambda i, k: (0, 0))]
        operands += [w_t, b2d]
        out_spec = pl.BlockSpec((tile_m, out_cols), lambda i, k: (i, 0))
        scratch = [pltpu.VMEM((tile_m, out_pad), jnp.float32)]
        kernel = functools.partial(_node_update_kernel_ktiled, **kernel_kwargs)
        dims = ("parallel", "arbitrary")
    else:
        grid = (pl.cdiv(N, tile_m),)
        in_specs = [pl.BlockSpec((tile_m, in_pad), lambda i: (i, 0))]
        operands = [h_in]
        if test:
            in_specs.append(pl.BlockSpec((tile_m, 1), lambda i: (i, 0)))
            operands.append(norm_in)
        in_specs += [pl.BlockSpec((in_pad, out_pad), lambda i: (0, 0)),
                     pl.BlockSpec((1, out_pad), lambda i: (0, 0))]
        operands += [w_t, b2d]
        out_spec = pl.BlockSpec((tile_m, out_cols), lambda i: (i, 0))
        scratch = []
        kernel = functools.partial(_node_update_kernel, **kernel_kwargs)
        dims = ("parallel",)

    flops = 2 * N * in_pad * out_pad
    bytes_acc = (h_in.size * itm + w_t.size * itm + b2d.size * 4
                 + N * out_cols * itm + (N * 4 if test else 0))
    cost = pl.CostEstimate(flops=flops, transcendentals=0, bytes_accessed=bytes_acc)

    out_p = pl.pallas_call(
        kernel,
        out_shape=jax.ShapeDtypeStruct((N, out_cols), h.dtype),
        grid_spec=pltpu.PrefetchScalarGridSpec(
            num_scalar_prefetch=0,
            grid=grid,
            in_specs=in_specs,
            out_specs=out_spec,
            scratch_shapes=scratch),
        compiler_params=pltpu.CompilerParams(
            dimension_semantics=dims,
            vmem_limit_bytes=vmem_limit),
        cost_estimate=cost,
    )(*operands)

    # Fast path: out_feats already lane-aligned -> no post-kernel HBM copy.
    if out_feats == out_pad:
        return out_p
    if concat:
        return jnp.concatenate(
            [out_p[:, :out_feats], out_p[:, out_pad:out_pad + out_feats]], axis=1)
    return out_p[:, :out_feats]


def _reference(h, norm, weight, bias, *, test, concat, activation):
    x = (h.astype(jnp.float32) * norm.astype(jnp.float32)) if test \
        else h.astype(jnp.float32)
    lin = x @ weight.astype(jnp.float32).T + bias.astype(jnp.float32)
    if concat:
        return jnp.concatenate([lin, activation(lin)], axis=1)
    if activation is not None:
        return activation(lin)
    return lin


if __name__ == "__main__":
    key = jax.random.PRNGKey(0)
    k_h, k_n, k_w, k_b, k_h2, k_w2, k_b2 = jax.random.split(key, 7)

    # Small GCN-layer-like shapes.
    N, in_feats, out_feats = 64, 32, 16
    h = jax.random.normal(k_h, (N, in_feats), dtype=jnp.float32)
    norm = jax.random.uniform(k_n, (N, 1), dtype=jnp.float32, minval=0.1, maxval=1.0)
    bound = 1.0 / math.sqrt(in_feats)
    weight = jax.random.uniform(k_w, (out_feats, in_feats), dtype=jnp.float32,
                                minval=-bound, maxval=bound)
    bias = jax.random.uniform(k_b, (out_feats,), dtype=jnp.float32,
                              minval=-bound, maxval=bound)

    configs = [
        dict(test=False, concat=False, activation=jax.nn.relu),  # plain GCN layer
        dict(test=True,  concat=False, activation=jax.nn.relu),  # test-time norm
        dict(test=False, concat=True,  activation=jax.nn.relu),  # FastGCN concat
        dict(test=False, concat=False, activation=None),         # no activation
    ]
    ok = True
    for cfg in configs:
        out = jax.block_until_ready(node_update(h, norm, weight, bias, **cfg))
        ref = _reference(h, norm, weight, bias, **cfg)
        ok &= bool(jnp.allclose(out, ref, atol=1e-5, rtol=1e-5))

    # Ragged N (not a multiple of the row tile) exercises masked edge blocks.
    out_r = jax.block_until_ready(
        node_update(h[:50], norm[:50], weight, bias,
                    test=True, concat=True, activation=jax.nn.relu))
    ref_r = _reference(h[:50], norm[:50], weight, bias,
                       test=True, concat=True, activation=jax.nn.relu)
    ok &= bool(jnp.allclose(out_r, ref_r, atol=1e-5, rtol=1e-5))

    # bf16 end-to-end (native MXU operands, f32 accumulation, f32 norm/bias).
    h16 = h.astype(jnp.bfloat16)
    w16 = weight.astype(jnp.bfloat16)
    b16 = bias.astype(jnp.bfloat16)
    out16 = jax.block_until_ready(
        node_update(h16, norm, w16, b16, test=True, concat=True,
                    activation=jax.nn.relu))
    ref16 = _reference(h16, norm, w16, b16, test=True, concat=True,
                       activation=jax.nn.relu)
    ok &= bool(jnp.allclose(out16.astype(jnp.float32), ref16, atol=5e-2, rtol=5e-2))

    # K-tiled path (forced via a tiny resident-weight threshold) + lane-aligned
    # fast path (out_feats % 128 == 0 -> no post-kernel copy).
    N2, in2, out2 = 72, 1024, 128
    h2 = jax.random.normal(k_h2, (N2, in2), dtype=jnp.float32)
    norm2 = jax.random.uniform(k_n, (N2, 1), dtype=jnp.float32, minval=0.1, maxval=1.0)
    bound2 = 1.0 / math.sqrt(in2)
    w2 = jax.random.uniform(k_w2, (out2, in2), dtype=jnp.float32,
                            minval=-bound2, maxval=bound2)
    b2 = jax.random.uniform(k_b2, (out2,), dtype=jnp.float32,
                            minval=-bound2, maxval=bound2)
    out_k = jax.block_until_ready(
        node_update(h2, norm2, w2, b2, test=True, concat=False,
                    activation=jax.nn.relu, max_resident_weight_bytes=1))
    ref_k = _reference(h2, norm2, w2, b2, test=True, concat=False,
                       activation=jax.nn.relu)
    ok &= bool(jnp.allclose(out_k, ref_k, atol=2e-2, rtol=2e-2))

    assert ok, "mismatch vs. reference"
    print("KERNEL_OK")
</pallas_src>

<mosaic_0001>
module attributes {stable_mosaic.version = 11 : i64} {
  func.func @_node_update_kernel(%arg0: i32, %arg1: memref<32x32xf32, #tpu.memory_space<vmem>>, %arg2: memref<32x128xf32, #tpu.memory_space<vmem>>, %arg3: memref<1x128xf32, #tpu.memory_space<vmem>>, %arg4: memref<32x128xf32, #tpu.memory_space<vmem>>) attributes {dimension_semantics = [#tpu.dimension_semantics<parallel>], iteration_bounds = array<i64: 2>, scalar_prefetch = 0 : i64, scratch_operands = 0 : i64, tpu.core_type = #tpu.core_type<tc>, window_params = [{transform_indices = @transform_0, window_bounds = array<i64: 32, 32>}, {pipeline_mode = #tpu.pipeline_mode<synchronous>, transform_indices = @transform_1, window_bounds = array<i64: 32, 128>}, {pipeline_mode = #tpu.pipeline_mode<synchronous>, transform_indices = @transform_2, window_bounds = array<i64: 1, 128>}, {transform_indices = @transform_3, window_bounds = array<i64: 32, 128>}]} {
    %c0 = arith.constant 0 : index
    %c0_0 = arith.constant 0 : index
    %0 = vector.load %arg1[%c0, %c0_0] : memref<32x32xf32, #tpu.memory_space<vmem>>, vector<32x32xf32>
    %c0_1 = arith.constant 0 : index
    %c0_2 = arith.constant 0 : index
    %1 = vector.load %arg2[%c0_1, %c0_2] : memref<32x128xf32, #tpu.memory_space<vmem>>, vector<32x128xf32>
    %cst = arith.constant dense<0.000000e+00> : vector<32x128xf32>
    %2 = tpu.matmul %0, %1, %cst {dimension_numbers = #tpu.dot_dimension_numbers<[1], [0], [0], [1], [0, 0, 1, 1], [], []>} : vector<32x32xf32>, vector<32x128xf32>, vector<32x128xf32> -> vector<32x128xf32>
    %c0_3 = arith.constant 0 : index
    %c0_4 = arith.constant 0 : index
    %3 = vector.load %arg3[%c0_3, %c0_4] : memref<1x128xf32, #tpu.memory_space<vmem>>, vector<1x128xf32>
    %4 = vector.broadcast %3 : vector<1x128xf32> to vector<32x128xf32>
    %5 = arith.addf %2, %4 : vector<32x128xf32>
    %cst_5 = arith.constant 0.000000e+00 : f32
    %6 = vector.broadcast %cst_5 : f32 to vector<32x128xf32>
    %7 = arith.maximumf %5, %6 : vector<32x128xf32>
    %c0_6 = arith.constant 0 : index
    %c0_7 = arith.constant 0 : index
    %8 = vector.load %arg4[%c0_6, %c0_7] : memref<32x128xf32, #tpu.memory_space<vmem>>, vector<32x128xf32>
    tpu.vector_store %arg4[%c0_6, %c0_7], %7 {strides = array<i32>} : memref<32x128xf32, #tpu.memory_space<vmem>>, vector<32x128xf32>,
    return
  }
  func.func @transform_0(%arg0: i32) -> (i32, i32) {
    %c0_i32 = arith.constant 0 : i32
    %c0_i32_0 = arith.constant 0 : i32
    return %arg0, %c0_i32 : i32, i32
  }
  func.func @transform_1(%arg0: i32) -> (i32, i32) {
    %c0_i32 = arith.constant 0 : i32
    %c0_i32_0 = arith.constant 0 : i32
    %c0_i32_1 = arith.constant 0 : i32
    return %c0_i32, %c0_i32_0 : i32, i32
  }
  func.func @transform_2(%arg0: i32) -> (i32, i32) {
    %c0_i32 = arith.constant 0 : i32
    %c0_i32_0 = arith.constant 0 : i32
    %c0_i32_1 = arith.constant 0 : i32
    return %c0_i32, %c0_i32_0 : i32, i32
  }
  func.func @transform_3(%arg0: i32) -> (i32, i32) {
    %c0_i32 = arith.constant 0 : i32
    %c0_i32_0 = arith.constant 0 : i32
    return %arg0, %c0_i32 : i32, i32
  }
}

</mosaic_0001>

<llo_original>
// kernel: tpu_custom_call.1
$region0: #{tpu_custom_call.1}
  #allocation0 [shape = 'u32[]', space=smem, size = 0x4, offset = 0x4, fixed_abs, tag = 'smem constant byte address 0x4 - core index']
  #allocation1 [shape = 'u32[72,128]{1,0:T(1,128)}', space=vmem, size = 0x9000, scoped, tag = 'internal scratch']
  %s0 = inlined_call_operand.vmem [shape: f32[64,32], index: 0, kind: input, shape index: {}]
  %s1 = inlined_call_operand.vmem [shape: f32[32,128], index: 1, kind: input, shape index: {}]
  %s2 = inlined_call_operand.vmem [shape: f32[1,128], index: 2, kind: input, shape index: {}]
  %s3 = inlined_call_operand.hbm [shape: f32[64,128], index: 3, kind: output, shape index: {}]
  %s4 = sld [smem:[#allocation0]]
  $region45: #{tpu_custom_call.1} parent=0
    _
  %s6 = ssub.s32 1, %s4
  %s7 = scalar_select 0, %s6, %s4
  $region1: #{tpu_custom_call.1} parent=0
    #allocation2 [shape = 'u8[32768]{0}', space=vmem, size = 0x8000, scoped, tag = 'output window, operand 0']
    #allocation3 [shape = 's32[2]{0}', space=sflag, size = 0x8, scoped, tag = 'scoped memory for tpu_custom_call.1']
    %8 = vsyncpa [#allocation3], 0
    %s9 = scalar_lea.sflag [#allocation3], 1
    %10 = vsyncpa %s9, 0
    loop: start=0, step=1, limit=4
    $region2: #{tpu_custom_call.1} parent=1 // loop_pre_header
      _
    $region3: #{tpu_custom_call.1} parent=1 // loop_header
      %s12 = sphi 0, %s16
      %p13 = scmp.ge.s32.totalorder %s12, 4
      %s22 = sphi 0, %s24
      %s25 = sphi 0, %s22
      %s26 = sphi 0, %s25
      %s42 = sphi 0, %s26
      %s46 = sphi 0, %s46
      %s48 = sphi 0, %s46
      %s49 = sphi 0, %s48
      %s63 = sphi 0, %s49
      %s67 = sphi 0, %s67
      %s69 = sphi 0, %s67
      %s70 = sphi 0, %s69
      %s84 = sphi 0, %s70
      %s90 = sphi 0, %s92
      %s93 = sphi 0, %s90
      %s94 = sphi 0, %s93
      %s110 = sphi 0, %s94
    $region4: #{tpu_custom_call.1} parent=1 // loop_header_branch
      %15 = sbr.rel (%p13) target = $region8
    $region5: #{tpu_custom_call.1} parent=1 // loop_body
      %s17 = ssub.s32 %s12, 1
      %s18 = ssub.s32 %s12, 2
      %s19 = sadd.s32 %s12, 1
      %s20 = ssub.s32 %s12, %s19
      %p21 = scmp.eq.s32.totalorder %s20, 0
      %s23 = sadd.s32 %s22, 1
      %s24 = scalar_select %p21, %s22, %s23
      %p27 = pneg %p21
      %p28 = scmp.eq.s32.totalorder %s12, 1
      %p29 = por %p27, %p28
      %p30 = scmp.ne.s32.totalorder %s22, %s25
      %p31 = scmp.eq.s32.totalorder %s12, 0
      %p32 = por %p30, %p31
      %p33 = scmp.ne.s32.totalorder %s22, %s25
      %p34 = scmp.eq.s32.totalorder %s17, 1
      %p35 = por %p33, %p34
      %p36 = scmp.ne.s32.totalorder %s25, %s26
      %p37 = scmp.eq.s32.totalorder %s17, 0
      %p38 = por %p36, %p37
      %p39 = scmp.ne.s32.totalorder %s25, %s26
      %p40 = scmp.eq.s32.totalorder %s18, 1
      %p41 = por %p39, %p40
      %p43 = scmp.ne.s32.totalorder %s26, %s42
      %p44 = scmp.eq.s32.totalorder %s18, 0
      %p45 = por %p43, %p44
      %s47 = sadd.s32 %s46, 1
      %p50 = scmp.eq.s32.totalorder %s12, 1
      %p51 = scmp.ne.s32.totalorder %s46, %s48
      %p52 = scmp.eq.s32.totalorder %s12, 0
      %p53 = por %p51, %p52
      %p54 = scmp.ne.s32.totalorder %s46, %s48
      %p55 = scmp.eq.s32.totalorder %s17, 1
      %p56 = por %p54, %p55
      %p57 = scmp.ne.s32.totalorder %s48, %s49
      %p58 = scmp.eq.s32.totalorder %s17, 0
      %p59 = por %p57, %p58
      %p60 = scmp.ne.s32.totalorder %s48, %s49
      %p61 = scmp.eq.s32.totalorder %s18, 1
      %p62 = por %p60, %p61
      %p64 = scmp.ne.s32.totalorder %s49, %s63
      %p65 = scmp.eq.s32.totalorder %s18, 0
      %p66 = por %p64, %p65
      %s68 = sadd.s32 %s67, 1
      %p71 = scmp.eq.s32.totalorder %s12, 1
      %p72 = scmp.ne.s32.totalorder %s67, %s69
      %p73 = scmp.eq.s32.totalorder %s12, 0
      %p74 = por %p72, %p73
      %p75 = scmp.ne.s32.totalorder %s67, %s69
      %p76 = scmp.eq.s32.totalorder %s17, 1
      %p77 = por %p75, %p76
      %p78 = scmp.ne.s32.totalorder %s69, %s70
      %p79 = scmp.eq.s32.totalorder %s17, 0
      %p80 = por %p78, %p79
      %p81 = scmp.ne.s32.totalorder %s69, %s70
      %p82 = scmp.eq.s32.totalorder %s18, 1
      %p83 = por %p81, %p82
      %p85 = scmp.ne.s32.totalorder %s70, %s84
      %p86 = scmp.eq.s32.totalorder %s18, 0
      %p87 = por %p85, %p86
      %s88 = ssub.s32 %s12, %s19
      %p89 = scmp.eq.s32.totalorder %s88, 0
      %s91 = sadd.s32 %s90, 1
      %s92 = scalar_select %p89, %s90, %s91
      %p95 = pneg %p89
      %p96 = scmp.eq.s32.totalorder %s12, 1
      %p97 = por %p95, %p96
      %p98 = scmp.ne.s32.totalorder %s90, %s93
      %p99 = scmp.eq.s32.totalorder %s12, 0
      %p100 = por %p98, %p99
      %p101 = scmp.ne.s32.totalorder %s90, %s93
      %p102 = scmp.eq.s32.totalorder %s17, 1
      %p103 = por %p101, %p102
      %p104 = scmp.ne.s32.totalorder %s93, %s94
      %p105 = scmp.eq.s32.totalorder %s17, 0
      %p106 = por %p104, %p105
      %p107 = scmp.ne.s32.totalorder %s93, %s94
      %p108 = scmp.eq.s32.totalorder %s18, 1
      %p109 = por %p107, %p108
      %p111 = scmp.ne.s32.totalorder %s94, %s110
      %p112 = scmp.eq.s32.totalorder %s18, 0
      %p113 = por %p111, %p112
      %p114 = scmp.le.s32.totalorder 1, %s12
      %p115 = scmp.lt.s32.totalorder %s12, 3
      %p116 = pnand %p114, %p115
      %p117 = pneg %p116
      // Predicated region
      $region9: #{tpu_custom_call.1} parent=5 // pred_check
        _
      $region10: #{tpu_custom_call.1} parent=5 // pred_check_branch
        %119 = sbr.rel (%p116) target = $region12
      $region11: #{tpu_custom_call.1} parent=5 // pred_region
        %s120 = ssub.s32 %s12, 1
        // Predicated region
        $region13: #{tpu_custom_call.1} parent=11 // pred_check
          %p121 = pneg %p59
        $region14: #{tpu_custom_call.1} parent=11 // pred_check_branch
          %123 = sbr.rel (%p121) target = $region16
        $region15: #{tpu_custom_call.1} parent=11 // pred_region
          _
        $region16: #{tpu_custom_call.1} parent=11 // pred_fallthru
          _
        // Predicated region
        $region17: #{tpu_custom_call.1} parent=11 // pred_check
          %p124 = pneg %p80
        $region18: #{tpu_custom_call.1} parent=11 // pred_check_branch
          %126 = sbr.rel (%p124) target = $region20
        $region19: #{tpu_custom_call.1} parent=11 // pred_region
          _
        $region20: #{tpu_custom_call.1} parent=11 // pred_fallthru
          _
      $region12: #{tpu_custom_call.1} parent=5 // pred_fallthru
        _
      %p127 = scmp.lt.s32.totalorder %s12, 2
      // Predicated region
      $region21: #{tpu_custom_call.1} parent=5 // pred_check
        %p128 = pneg %p127
      $region22: #{tpu_custom_call.1} parent=5 // pred_check_branch
        %130 = sbr.rel (%p128) target = $region24
      $region23: #{tpu_custom_call.1} parent=5 // pred_region
        // Predicated region
        $region25: #{tpu_custom_call.1} parent=23 // pred_check
          %p131 = pneg %p32
        $region26: #{tpu_custom_call.1} parent=23 // pred_check_branch
          %133 = sbr.rel (%p131) target = $region28
        $region27: #{tpu_custom_call.1} parent=23 // pred_region
          %s134 = smul.u32 4, %s12
          %p135 = scmp.lt.s32.totalorder %s134, 7
          %s136 = scalar_select %p135, %s134, 7
          %s137 = smul.addr %s136, 8
          %s138 = scalar_lea.vmem %s0, %s137
          %s139 = smul.u32 4, %s12
        $region28: #{tpu_custom_call.1} parent=23 // pred_fallthru
          _
      $region24: #{tpu_custom_call.1} parent=5 // pred_fallthru
        _
      %p140 = scmp.le.s32.totalorder 1, %s12
      %p141 = scmp.lt.s32.totalorder %s12, 3
      %p142 = pnand %p140, %p141
      %p143 = pneg %p142
      // Predicated region
      $region29: #{tpu_custom_call.1} parent=5 // pred_check
        _
      $region30: #{tpu_custom_call.1} parent=5 // pred_check_branch
        %145 = sbr.rel (%p142) target = $region32
      $region31: #{tpu_custom_call.1} parent=5 // pred_region
        %s146 = ssub.s32 %s12, 1
        %s147 = smul.u32 4, %s17
        %p148 = scmp.lt.s32.totalorder %s147, 7
        %s149 = scalar_select %p148, %s147, 7
        %s150 = smul.addr %s149, 8
        %s151 = scalar_lea.vmem %s0, %s150
        %p152 = pneg %p38
        %p153 = pneg %p35
        %p154 = pneg %p59
        %p155 = pneg %p56
        %p156 = pneg %p80
        %p157 = pneg %p77
        %p158 = pneg %p106
        %p159 = pneg %p103
        %s160 = sand.u32 %s93, 1
        %s161 = scalar_lea.sflag [#allocation3], %s160
        %s162 = sand.u32 %s93, 1
        %s163 = smul.addr %s162, 32
        %s164 = scalar_lea.vmem [#allocation2], %s163
        %s165 = smul.u32 4, %s17
        %p166 = scmp.lt.s32.totalorder %s165, 7
        %s167 = scalar_select %p166, %s165, 7
        %s168 = smul.addr %s167, 8
        %s169 = scalar_lea.vmem %s0, %s168
        %s170 = smul.u32 4, %s17
        %s171 = smul.u32 4, %s17
        %v172 = vld [vmem:[%s169] sm:$0xff]
        %v173 = vld [vmem:[%s169 + $0x8] sm:$0xff]
        %v174 = vld [vmem:[%s169 + $0x10] sm:$0xff]
        %v175 = vld [vmem:[%s169 + $0x18] sm:$0xff]
        %v176 = vld [vmem:[%s1] sm:$0xff]
        %v177 = vld [vmem:[%s1 + $0x8] sm:$0xff]
        %v178 = vld [vmem:[%s1 + $0x10] sm:$0xff]
        %v179 = vld [vmem:[%s1 + $0x18] sm:$0xff]
        %v180 = vld [vmem:[%s2] sm:$0x1]
        %v182 = vperm.slane %v180, 0
        %vm184 = vcmask 261120
        %v186 = vsel %vm184, %v172, 0
        %v189 = vsel %vm184, %v173, 0
        %v192 = vsel %vm184, %v174, 0
        %v195 = vsel %vm184, %v175, 0
        %197 = vmatpush.msra.mxu0 0.0
        %198 = vmatpush.msra.mxu0 0.0
        %199 = vmatpush.msra.mxu0 0.0
        %200 = vmatpush.msra.mxu0 0.0
        %201 = vmatpush.msra.mxu0 0.0
        %202 = vmatpush.msra.mxu0 0.0
        %203 = vmatpush.msra.mxu0 0.0
        %204 = vmatpush.msra.mxu0 0.0
        %205 = vmatpush.msra.mxu0 0.0
        %206 = vmatpush.msra.mxu0 0.0
        %207 = vmatpush.msra.mxu0 0.0
        %208 = vmatpush.msra.mxu0 0.0
        %209 = vmatpush.msra.mxu0 %v179
        %210 = vmatpush.msra.mxu0 %v178
        %211 = vmatpush.msra.mxu0 %v177
        %212 = vmatpush.msra.mxu0 %v176
        %213 = vmatmul.f32.gmra.mxu0 %v186
        %v214 = vpop.f32.mrf.mxu0
        %v215 = vadd.f32 %v182, %v214
        %216 = vmatmul.f32.gmra.mxu0 %v189
        %v217 = vpop.f32.mrf.mxu0
        %v218 = vadd.f32 %v182, %v217
        %219 = vmatmul.f32.gmra.mxu0 %v192
        %v220 = vpop.f32.mrf.mxu0
        %v221 = vadd.f32 %v182, %v220
        %222 = vmatmul.f32.gmra.mxu0 %v195
        %v223 = vpop.f32.mrf.mxu0
        %v224 = vadd.f32 %v182, %v223
        %225 = vdwg.mxu0
        %v226 = vmax.f32 %v215, 0.0
        %v227 = vmax.f32 %v218, 0.0
        %v228 = vmax.f32 %v221, 0.0
        %v229 = vmax.f32 %v224, 0.0
        %230 = vst [vmem:[%s164] sm:$0xff] %v226
        %231 = vst [vmem:[%s164 + $0x8] sm:$0xff] %v227
        %232 = vst [vmem:[%s164 + $0x10] sm:$0xff] %v228
        %233 = vst [vmem:[%s164 + $0x18] sm:$0xff] %v229
        %s234 = sand.u32 %s93, 1
        %s235 = scalar_lea.sflag [#allocation3], %s234
        %s236 = sand.u32 %s93, 1
        %s237 = smul.addr %s236, 32
        %s238 = scalar_lea.vmem [#allocation2], %s237
        // Predicated region
        $region33: #{tpu_custom_call.1} parent=31 // pred_check
          %p239 = pneg %p103
        $region34: #{tpu_custom_call.1} parent=31 // pred_check_branch
          %241 = sbr.rel (%p239) target = $region36
        $region35: #{tpu_custom_call.1} parent=31 // pred_region
          %s242 = smul.u32 4, %s17
          %244 = vsyncadd %s235, 0
          %s245 = smul.addr %s242, 8
          %s246 = scalar_lea.hbm %s3, %s245
          %s247 = sshll.u32 %s238, 4
          %s248 = int_to_ptr.vmem [resolvable:$true] %s247
          %s249 = sshll.u32 %s246, 4
          %s250 = int_to_ptr.hbm [resolvable:$true] %s249
          %255 = dma.vmem_to_hbm [thread:$0]  %s248, 512, %s250, %s235, 128, 128, 8
        $region36: #{tpu_custom_call.1} parent=31 // pred_fallthru
          _
      $region32: #{tpu_custom_call.1} parent=5 // pred_fallthru
        _
      %p256 = scmp.le.s32.totalorder 2, %s12
      // Predicated region
      $region37: #{tpu_custom_call.1} parent=5 // pred_check
        %p257 = pneg %p256
      $region38: #{tpu_custom_call.1} parent=5 // pred_check_branch
        %259 = sbr.rel (%p257) target = $region40
      $region39: #{tpu_custom_call.1} parent=5 // pred_region
        %s260 = ssub.s32 %s12, 2
        // Predicated region
        $region41: #{tpu_custom_call.1} parent=39 // pred_check
          %p261 = pneg %p109
        $region42: #{tpu_custom_call.1} parent=39 // pred_check_branch
          %263 = sbr.rel (%p261) target = $region44
        $region43: #{tpu_custom_call.1} parent=39 // pred_region
          %s264 = sand.u32 %s94, 1
          %s265 = scalar_lea.sflag [#allocation3], %s264
          %s266 = sand.u32 %s94, 1
          %s267 = smul.addr %s266, 32
          %s268 = scalar_lea.vmem [#allocation2], %s267
          %270 = dma.done %s265, 512
        $region44: #{tpu_custom_call.1} parent=39 // pred_fallthru
          _
      $region40: #{tpu_custom_call.1} parent=5 // pred_fallthru
        _
    $region6: #{tpu_custom_call.1} parent=1 // loop_footer
      %s16 = sadd.s32 1, %s12
    $region7: #{tpu_custom_call.1} parent=1 // loop_footer_branch
      %11 = sbr.rel target = $region3
    $region8: #{tpu_custom_call.1} parent=1 // loop_exit
      _
    %271 = vsyncpa [#allocation3], 1
    %s272 = scalar_lea.sflag [#allocation3], 1
    %273 = vsyncpa %s272, 1

</llo_original>
